<compile_context>
chip_gen: v5e
topology: v5e:2x2
jax: 0.10.0
libtpu: 0.0.40
codegen_flags: <defaults>
</compile_context>

<pallas_src>
import functools

import jax
import jax.numpy as jnp
from jax.experimental import pallas as pl
from jax.experimental.pallas import tpu as pltpu


_DEFAULT_TILE_M = 1024            # raised from 512 per perf review
_VMEM_STREAM_BUDGET = 20 << 20    # cap on double-buffered x/out tiles (bytes)


def _round_up(x, m):
    return ((x + m - 1) // m) * m


def _offset_sampler_kernel(x_ref, w_ref, b_ref, o_ref):
    # x_ref: (TILE_M, C) f32    w_ref: (C, O) bf16
    # b_ref: (1, O) f32         o_ref: (TILE_M, O) out_dtype
    # In-kernel bf16 cast of the activations (VALU has massive slack; keeps the
    # HBM read stream at its original f32 without an extra host-side pass).
    x_bf = x_ref[...].astype(jnp.bfloat16)
    logits = jnp.dot(x_bf, w_ref[...], preferred_element_type=jnp.float32)
    logits = logits + b_ref[...]                 # broadcast (1, O) -> (TILE_M, O)
    o_ref[...] = jax.nn.sigmoid(logits).astype(o_ref.dtype)


@functools.partial(jax.jit, static_argnames=("tile_m", "out_dtype"))
def offset_sampler_forward(query, weight, bias, *, tile_m=_DEFAULT_TILE_M,
                           out_dtype=jnp.bfloat16):
    """query: [B, Q, C]; weight: [O, C] (nn.Linear layout); bias: [O].

    Returns sigmoid(query @ weight^T + bias) as [B, Q, O] in `out_dtype`
    (bf16 by default — pass out_dtype=jnp.float32 for module-exact precision).
    """
    B, Q, C = query.shape
    O = weight.shape[0]
    M = B * Q
    out_bytes = jnp.dtype(out_dtype).itemsize

    # ---- tile-size selection (all static Python shape math) -----------------
    if M <= 16:
        tile_m_eff = M                               # one full-extent block
    else:
        # Big tiles amortize the ~0.35 us/step overhead, but keep grid_m >= 2
        # so the ("parallel",) axis can shard across v7x's two TensorCores.
        tile_m_eff = min(tile_m, _round_up(pl.cdiv(M, 2), 16))
        tile_m_eff = max(16, _round_up(tile_m_eff, 16))   # bf16 sublane packing
        # Keep double-buffered streaming tiles well under scoped VMEM
        # (16 MiB default on v5e; 32 MiB requested below).
        while tile_m_eff > 16 and 2 * tile_m_eff * (C * 4 + O * out_bytes) > _VMEM_STREAM_BUDGET:
            tile_m_eff = max(16, _round_up(tile_m_eff // 2, 16))
    grid_m = pl.cdiv(M, tile_m_eff)                  # ragged last block is masked

    # ---- host-side prep: only tiny, one-time work ----------------------------
    x2d = query.reshape(M, C)                        # free view of contiguous dims
    w_t = weight.T.astype(jnp.bfloat16)              # (C, O), resident on-chip
    bias2d = bias.reshape(1, O).astype(jnp.float32)  # (1, O), added post-accumulation

    cost = pl.CostEstimate(
        flops=2 * M * C * O,
        transcendentals=M * O,                       # sigmoid exp on the EUP
        bytes_accessed=M * C * 4 + C * O * 2 + O * 4 + M * O * out_bytes,
    )

    out2d = pl.pallas_call(
        _offset_sampler_kernel,
        out_shape=jax.ShapeDtypeStruct((M, O), out_dtype),
        grid_spec=pl.GridSpec(
            grid=(grid_m,),
            in_specs=[
                pl.BlockSpec((tile_m_eff, C), lambda i: (i, 0)),   # streamed x tiles
                pl.BlockSpec((C, O), lambda i: (0, 0)),            # resident W
                pl.BlockSpec((1, O), lambda i: (0, 0)),            # resident bias
            ],
            out_specs=pl.BlockSpec((tile_m_eff, O), lambda i: (i, 0)),
        ),
        compiler_params=pltpu.CompilerParams(
            dimension_semantics=("parallel",),       # independent M tiles
            vmem_limit_bytes=32 << 20,               # explicit headroom (v5e default 16 MiB)
        ),
        cost_estimate=cost,
    )(x2d, w_t, bias2d)

    return out2d.reshape(B, Q, O)                    # contiguous reshape: free view


def init_offset_sampler_params(key, embed_dim, num_heads, num_cams, num_points):
    """Matches the PyTorch _reset_parameters: weight = 0, bias ~ Normal(0, 1)."""
    out_dim = num_heads * num_cams * num_points * 3
    weight = jnp.zeros((out_dim, embed_dim), dtype=jnp.float32)   # nn.Linear weight (O, C)
    bias = jax.random.normal(key, (out_dim,), dtype=jnp.float32)  # normal_(mean=0, std=1)
    return weight, bias


if __name__ == "__main__":
    # Small shapes consistent with the module.
    B, Q, C = 2, 8, 32
    num_heads, num_cams, num_points = 4, 2, 2
    out_dim = num_heads * num_cams * num_points * 3  # 48

    key = jax.random.PRNGKey(0)
    k_q, k_w, k_b, k_q2 = jax.random.split(key, 4)

    query = jax.random.normal(k_q, (B, Q, C), dtype=jnp.float32)

    # 1) Module-faithful init (weight = 0, bias ~ N(0, 1)): output is sigmoid(bias).
    weight0, bias0 = init_offset_sampler_params(k_b, C, num_heads, num_cams, num_points)
    out0 = jax.block_until_ready(offset_sampler_forward(query, weight0, bias0))
    ref0 = jax.nn.sigmoid(jnp.zeros((B, Q, out_dim), jnp.float32) + bias0[None, None, :])
    assert out0.shape == (B, Q, out_dim)
    assert out0.dtype == jnp.bfloat16
    assert jnp.allclose(out0.astype(jnp.float32), ref0, atol=1e-2, rtol=0)

    # 2) Non-trivial weights, default bf16 output: loose check vs full-f32 reference
    #    (covers bf16 input rounding + bf16 output rounding on values in [0, 1]).
    weight = 0.1 * jax.random.normal(k_w, (out_dim, C), dtype=jnp.float32)
    out = jax.block_until_ready(offset_sampler_forward(query, weight, bias0))
    ref_f32 = jax.nn.sigmoid(jnp.einsum("bqc,oc->bqo", query, weight) + bias0[None, None, :])
    assert out.shape == (B, Q, out_dim)
    assert jnp.allclose(out.astype(jnp.float32), ref_f32, atol=2e-2, rtol=0)

    # 3) f32 output path + ragged M (M = 111 -> 2 grid steps, partial last block):
    #    tight check vs a reference with matching bf16 input rounding.
    B2, Q2 = 3, 37
    query2 = jax.random.normal(k_q2, (B2, Q2, C), dtype=jnp.float32)
    out2 = jax.block_until_ready(
        offset_sampler_forward(query2, weight, bias0, out_dtype=jnp.float32))
    q_bf = query2.astype(jnp.bfloat16).astype(jnp.float32)
    w_bf = weight.astype(jnp.bfloat16).astype(jnp.float32)
    ref_bf = jax.nn.sigmoid(jnp.einsum("bqc,oc->bqo", q_bf, w_bf) + bias0[None, None, :])
    assert out2.shape == (B2, Q2, out_dim)
    assert jnp.allclose(out2, ref_bf, atol=1e-4, rtol=1e-4)

    print("KERNEL_OK")
</pallas_src>

<mosaic_0001>
module attributes {stable_mosaic.version = 11 : i64} {
  func.func @_offset_sampler_kernel(%arg0: i32, %arg1: memref<16x32xf32, #tpu.memory_space<vmem>>, %arg2: memref<32x48xbf16, #tpu.memory_space<vmem>>, %arg3: memref<1x48xf32, #tpu.memory_space<vmem>>, %arg4: memref<16x48xbf16, #tpu.memory_space<vmem>>) attributes {dimension_semantics = [#tpu.dimension_semantics<parallel>], iteration_bounds = array<i64: 1>, scalar_prefetch = 0 : i64, scratch_operands = 0 : i64, tpu.core_type = #tpu.core_type<tc>, window_params = [{transform_indices = @transform_0, window_bounds = array<i64: 16, 32>}, {pipeline_mode = #tpu.pipeline_mode<synchronous>, transform_indices = @transform_1, window_bounds = array<i64: 32, 48>}, {pipeline_mode = #tpu.pipeline_mode<synchronous>, transform_indices = @transform_2, window_bounds = array<i64: 1, 48>}, {transform_indices = @transform_3, window_bounds = array<i64: 16, 48>}]} {
    %c0 = arith.constant 0 : index
    %c0_0 = arith.constant 0 : index
    %0 = vector.load %arg1[%c0, %c0_0] : memref<16x32xf32, #tpu.memory_space<vmem>>, vector<16x32xf32>
    %1 = arith.truncf %0 : vector<16x32xf32> to vector<16x32xbf16>
    %c0_1 = arith.constant 0 : index
    %c0_2 = arith.constant 0 : index
    %2 = vector.load %arg2[%c0_1, %c0_2] : memref<32x48xbf16, #tpu.memory_space<vmem>>, vector<32x48xbf16>
    %cst = arith.constant dense<0.000000e+00> : vector<16x48xf32>
    %3 = tpu.matmul %1, %2, %cst {dimension_numbers = #tpu.dot_dimension_numbers<[1], [0], [0], [1], [0, 0, 1, 1], [], []>} : vector<16x32xbf16>, vector<32x48xbf16>, vector<16x48xf32> -> vector<16x48xf32>
    %c0_3 = arith.constant 0 : index
    %c0_4 = arith.constant 0 : index
    %4 = vector.load %arg3[%c0_3, %c0_4] : memref<1x48xf32, #tpu.memory_space<vmem>>, vector<1x48xf32>
    %5 = vector.broadcast %4 : vector<1x48xf32> to vector<16x48xf32>
    %6 = arith.addf %3, %5 : vector<16x48xf32>
    %7 = arith.negf %6 : vector<16x48xf32>
    %8 = math.exp %7 : vector<16x48xf32>
    %cst_5 = arith.constant 1.000000e+00 : f32
    %9 = vector.broadcast %cst_5 : f32 to vector<16x48xf32>
    %10 = arith.addf %9, %8 : vector<16x48xf32>
    %11 = arith.divf %9, %10 : vector<16x48xf32>
    %12 = arith.truncf %11 : vector<16x48xf32> to vector<16x48xbf16>
    %c0_6 = arith.constant 0 : index
    %c0_7 = arith.constant 0 : index
    %13 = vector.load %arg4[%c0_6, %c0_7] : memref<16x48xbf16, #tpu.memory_space<vmem>>, vector<16x48xbf16>
    tpu.vector_store %arg4[%c0_6, %c0_7], %12 {strides = array<i32>} : memref<16x48xbf16, #tpu.memory_space<vmem>>, vector<16x48xbf16>,
    return
  }
  func.func @transform_0(%arg0: i32) -> (i32, i32) {
    %c0_i32 = arith.constant 0 : i32
    %c0_i32_0 = arith.constant 0 : i32
    return %arg0, %c0_i32 : i32, i32
  }
  func.func @transform_1(%arg0: i32) -> (i32, i32) {
    %c0_i32 = arith.constant 0 : i32
    %c0_i32_0 = arith.constant 0 : i32
    %c0_i32_1 = arith.constant 0 : i32
    return %c0_i32, %c0_i32_0 : i32, i32
  }
  func.func @transform_2(%arg0: i32) -> (i32, i32) {
    %c0_i32 = arith.constant 0 : i32
    %c0_i32_0 = arith.constant 0 : i32
    %c0_i32_1 = arith.constant 0 : i32
    return %c0_i32, %c0_i32_0 : i32, i32
  }
  func.func @transform_3(%arg0: i32) -> (i32, i32) {
    %c0_i32 = arith.constant 0 : i32
    %c0_i32_0 = arith.constant 0 : i32
    return %arg0, %c0_i32 : i32, i32
  }
}

</mosaic_0001>

<llo_original>
// kernel: offset_sampler_forward.1
$region0: #{offset_sampler_forward.1}
  #allocation0 [shape = 'u32[]', space=smem, size = 0x4, offset = 0x4, fixed_abs, tag = 'smem constant byte address 0x4 - core index']
  #allocation1 [shape = 'u32[72,128]{1,0:T(1,128)}', space=vmem, size = 0x9000, scoped, tag = 'internal scratch']
  %s0 = inlined_call_operand.vmem [shape: f32[16,32], index: 0, kind: input, shape index: {}]
  %s1 = inlined_call_operand.vmem [shape: bf16[32,48], index: 1, kind: input, shape index: {}]
  %s2 = inlined_call_operand.vmem [shape: f32[1,48], index: 2, kind: input, shape index: {}]
  %s3 = inlined_call_operand.hbm [shape: bf16[16,48], index: 3, kind: output, shape index: {}]
  %s4 = sld [smem:[#allocation0]]
  $region22: #{offset_sampler_forward.1} parent=0
    _
  %s6 = ssub.s32 1, %s4
  %s7 = scalar_select 0, %s6, %s4
  $region1: #{offset_sampler_forward.1} parent=0
    #allocation2 [shape = 'u8[4096]{0}', space=vmem, size = 0x1000, scoped, tag = 'output window, operand 0, single buffered']
    #allocation3 [shape = 's32[1]{0}', space=sflag, size = 0x4, scoped, tag = 'scoped memory for offset_sampler_forward.1']
    %8 = vsyncpa [#allocation3], 0
    // Predicated region
    $region2: #{offset_sampler_forward.1} parent=1 // pred_check
      _
    $region3: #{offset_sampler_forward.1} parent=1 // pred_check_branch
      %10 = sbr.rel (0) target = $region5
    $region4: #{offset_sampler_forward.1} parent=1 // pred_region
      _
    $region5: #{offset_sampler_forward.1} parent=1 // pred_fallthru
      _
    // Predicated region
    $region6: #{offset_sampler_forward.1} parent=1 // pred_check
      _
    $region7: #{offset_sampler_forward.1} parent=1 // pred_check_branch
      %12 = sbr.rel (0) target = $region9
    $region8: #{offset_sampler_forward.1} parent=1 // pred_region
      _
    $region9: #{offset_sampler_forward.1} parent=1 // pred_fallthru
      _
    // Predicated region
    $region10: #{offset_sampler_forward.1} parent=1 // pred_check
      _
    $region11: #{offset_sampler_forward.1} parent=1 // pred_check_branch
      %14 = sbr.rel (0) target = $region13
    $region12: #{offset_sampler_forward.1} parent=1 // pred_region
      _
    $region13: #{offset_sampler_forward.1} parent=1 // pred_fallthru
      _
    %v16 = vld [vmem:[%s0] sm:$0xff]
    %v17 = vld [vmem:[%s0 + $0x8] sm:$0xff]
    %v18 = vpack.c.bf16 %v17, %v16
    %v19 = vld [vmem:[%s1] sm:$0xf]
    %v20 = vld [vmem:[%s1 + $0x4] sm:$0xf]
    %v21 = vld [vmem:[%s1 + $0x8] sm:$0xf]
    %v22 = vld [vmem:[%s1 + $0xc] sm:$0xf]
    %v23 = vld [vmem:[%s2] sm:$0x1]
    %v25 = vperm.slane %v23, 0
    %v31 = vunpack.c.l.b16 %v19
    %v32 = vunpack.c.l.b16 %v20
    %v33 = vunpack.c.l.b16 %v21
    %v34 = vunpack.c.l.b16 %v22
    %v35 = vpack.c.b16 %v32, %v31
    %v36 = vpack.c.b16 %v34, %v33
    %vm39 = vcmask 261120
    %v41 = vsel %vm39, %v18, 0
    %43 = vmatpush.bf16.msra.mxu0 0
    %44 = vmatpush.bf16.msra.mxu0 0
    %45 = vmatpush.bf16.msra.mxu0 0
    %46 = vmatpush.bf16.msra.mxu0 0
    %47 = vmatpush.bf16.msra.mxu0 0
    %48 = vmatpush.bf16.msra.mxu0 0
    %49 = vmatpush.bf16.msra.mxu0 %v36
    %50 = vmatpush.bf16.msra.mxu0 %v35
    %51 = vmatmul.bf16.gmra.mxu0 %v41
    %v52 = vpop.f32.mrf.mxu0
    %v53 = vadd.f32 %v25, %v52
    %v54 = vpop.f32.mrf.mxu0
    %v55 = vadd.f32 %v25, %v54
    %56 = vdwg.mxu0
    %v57 = vxor.u32 %v53, 2147483648
    %v58 = vxor.u32 %v55, 2147483648
    %v59 = vmul.f32 %v57, 1.442695
    %v60 = vpow.pop %v59
    %v61 = vmul.f32 %v58, 1.442695
    %v62 = vpow.pop %v61
    %v63 = vadd.f32 %v60, 1.0
    %v64 = vadd.f32 %v62, 1.0
    %v65 = vrcp.pop %v63
    %v66 = vmul.f32 %v63, %v65
    %v67 = vsub.f32 1.0, %v66
    %v68 = vmul.f32 %v65, %v67
    %v69 = vadd.f32 %v65, %v68
    %vm70 = vweird.f32 %v63
    %vm71 = vweird.f32 %v65
    %vm72 = vmor %vm70, %vm71
    %v73 = vsel %vm72, %v65, %v69
    %v74 = vand.u32 2147483647, %v63
    %vm75 = vcmp.eq.f32.partialorder %v74, 8.507059e+37
    %v76 = vand.u32 %v63, 2147483648
    %v77 = vor.u32 1.1754944e-38, %v76
    %v78 = vsel %vm75, %v77, %v73
    %v79 = vmul.f32 1.0, %v78
    %v80 = vrcp.pop %v64
    %v81 = vmul.f32 %v64, %v80
    %v82 = vsub.f32 1.0, %v81
    %v83 = vmul.f32 %v80, %v82
    %v84 = vadd.f32 %v80, %v83
    %vm85 = vweird.f32 %v64
    %vm86 = vweird.f32 %v80
    %vm87 = vmor %vm85, %vm86
    %v88 = vsel %vm87, %v80, %v84
    %v89 = vand.u32 2147483647, %v64
    %vm90 = vcmp.eq.f32.partialorder %v89, 8.507059e+37
    %v91 = vand.u32 %v64, 2147483648
    %v92 = vor.u32 1.1754944e-38, %v91
    %v93 = vsel %vm90, %v92, %v88
    %v94 = vmul.f32 1.0, %v93
    %v95 = vpack.c.bf16 %v79, %v79
    %v96 = vpack.c.bf16 %v94, %v94
    %vm97 = vcmask 388096
    %98 = vst.msk [vmem:[#allocation2] sm:$0xf] %vm97, %v95
    %99 = vst.msk [vmem:[#allocation2 + $0x4] sm:$0xf] %vm97, %v96
    // Predicated region
    $region14: #{offset_sampler_forward.1} parent=1 // pred_check
      _
    $region15: #{offset_sampler_forward.1} parent=1 // pred_check_branch
      %101 = sbr.rel (0) target = $region17
    $region16: #{offset_sampler_forward.1} parent=1 // pred_region
      %103 = vsyncadd [#allocation3], 0
      %s104 = sshll.u32 [#allocation2], 4
      %s105 = int_to_ptr.vmem [resolvable:$true] %s104
      %s106 = sshll.u32 %s3, 4
      %s107 = int_to_ptr.hbm [resolvable:$true] %s106
      %112 = dma.vmem_to_hbm [thread:$0]  %s105, 128, %s107, [#allocation3], 64, 64, 4
    $region17: #{offset_sampler_forward.1} parent=1 // pred_fallthru
      _
    // Predicated region
    $region18: #{offset_sampler_forward.1} parent=1 // pred_check
      _
    $region19: #{offset_sampler_forward.1} parent=1 // pred_check_branch
      %114 = sbr.rel (0) target = $region21
    $region20: #{offset_sampler_forward.1} parent=1 // pred_region
      %116 = dma.done [#allocation3], 128
    $region21: #{offset_sampler_forward.1} parent=1 // pred_fallthru
      _
    %117 = vsyncpa [#allocation3], 1

</llo_original>
